<compile_context>
chip_gen: v5e
topology: v5e:2x2
jax: 0.10.0
libtpu: 0.0.40
codegen_flags: <defaults>
</compile_context>

<pallas_src>
import functools

import jax
import jax.numpy as jnp
from jax.experimental import pallas as pl
from jax.experimental.pallas import tpu as pltpu  # noqa: F401  (TPU backend)


# ----------------------------------------------------------------------------
# helpers
# ----------------------------------------------------------------------------
def _round_up(n, m):
    return ((n + m - 1) // m) * m


def _full_spec(shape):
    # whole-array VMEM block; grid is (), so index_map takes no args.
    return pl.BlockSpec(shape, lambda: (0,) * len(shape))


# ----------------------------------------------------------------------------
# fused LayerNorm + Linear kernel
# ----------------------------------------------------------------------------
def _mlp_classifier_kernel(x_ref, g_ref, b_ref, wt_ref, fb_ref, o_ref, *,
                           e_true, eps):
    # x:  (Mp, Ep)  zero-padded activations (lane-dense, Ep % 128 == 0)
    # g,b:(1, Ep)   LayerNorm gamma/beta, zero in padded lanes
    # wt: (Ep, Cp)  pre-transposed fc weight, zero in padded rows/cols
    # fb: (1, Cp)   fc bias, zero in padded lanes
    x = x_ref[...].astype(jnp.float32)

    inv_e = 1.0 / e_true
    lane = jax.lax.broadcasted_iota(jnp.int32, x.shape, 1)
    valid = lane < e_true

    # padded input lanes are zero, so plain sums divided by the true E are exact
    mean = jnp.sum(x, axis=-1, keepdims=True) * inv_e
    d = jnp.where(valid, x - mean, 0.0)           # mask centering in padded lanes
    var = jnp.sum(d * d, axis=-1, keepdims=True) * inv_e
    xn = d * jax.lax.rsqrt(var + eps)

    h = xn * g_ref[...] + b_ref[...]              # padded lanes stay exactly zero

    # canonical (M,K)x(K,N) matmul on the MXU, f32 accumulation
    o = jnp.dot(h, wt_ref[...], preferred_element_type=jnp.float32)
    o_ref[...] = (o + fb_ref[...]).astype(o_ref.dtype)


def mlp_classifier(x, ln_g, ln_b, fc_w, fc_b, *, eps=1e-5):
    """y = Linear(LayerNorm(x));  x: (M, E), fc_w: (C, E) (torch layout)."""
    M, E = x.shape
    C = fc_w.shape[0]

    # lane/sublane-dense padded shapes
    Mp = _round_up(max(M, 8), 8)
    Ep = _round_up(max(E, 128), 128)
    Cp = _round_up(max(C, 128), 128)

    xp = jnp.zeros((Mp, Ep), x.dtype).at[:M, :E].set(x)
    gp = jnp.zeros((1, Ep), jnp.float32).at[0, :E].set(ln_g)
    bp = jnp.zeros((1, Ep), jnp.float32).at[0, :E].set(ln_b)
    # pre-transpose the weight once (trace-time) -> (K, N) operand for the MXU
    wtp = jnp.zeros((Ep, Cp), jnp.float32).at[:E, :C].set(fc_w.T)
    fbp = jnp.zeros((1, Cp), jnp.float32).at[0, :C].set(fc_b)

    kernel = functools.partial(_mlp_classifier_kernel, e_true=E, eps=eps)
    out = pl.pallas_call(
        kernel,
        out_shape=jax.ShapeDtypeStruct((Mp, Cp), x.dtype),
        in_specs=[_full_spec((Mp, Ep)),   # x
                  _full_spec((1, Ep)),    # gamma
                  _full_spec((1, Ep)),    # beta
                  _full_spec((Ep, Cp)),   # fc weight (transposed, padded)
                  _full_spec((1, Cp))],   # fc bias
        out_specs=_full_spec((Mp, Cp)),
    )(xp, gp, bp, wtp, fbp)

    return out[:M, :C]


# ----------------------------------------------------------------------------
# pure-JAX reference (matches the PyTorch module exactly)
# ----------------------------------------------------------------------------
def mlp_classifier_ref(x, ln_g, ln_b, fc_w, fc_b, *, eps=1e-5):
    mean = jnp.mean(x, axis=-1, keepdims=True)
    var = jnp.mean((x - mean) ** 2, axis=-1, keepdims=True)
    xn = (x - mean) / jnp.sqrt(var + eps)
    h = xn * ln_g + ln_b
    return h @ fc_w.T + fc_b


# ----------------------------------------------------------------------------
if __name__ == "__main__":
    embed_dim = 32
    num_classes = 10
    batch = 8

    key = jax.random.PRNGKey(0)
    kx, kg, kb, kw, kfb = jax.random.split(key, 5)

    x = jax.random.normal(kx, (batch, embed_dim), jnp.float32)
    ln_g = 1.0 + 0.1 * jax.random.normal(kg, (embed_dim,), jnp.float32)
    ln_b = 0.1 * jax.random.normal(kb, (embed_dim,), jnp.float32)
    fc_w = 0.02 * jax.random.normal(kw, (num_classes, embed_dim), jnp.float32)
    fc_b = 0.1 * jax.random.normal(kfb, (num_classes,), jnp.float32)

    fwd = jax.jit(mlp_classifier)
    out = fwd(x, ln_g, ln_b, fc_w, fc_b)
    jax.block_until_ready(out)

    ref = mlp_classifier_ref(x, ln_g, ln_b, fc_w, fc_b)

    assert out.shape == (batch, num_classes), out.shape
    assert bool(jnp.all(jnp.isfinite(out)))
    assert bool(jnp.allclose(out, ref, atol=1e-5, rtol=1e-5)), (
        float(jnp.max(jnp.abs(out - ref))))
    print("KERNEL_OK")
</pallas_src>

<mosaic_0001>
module attributes {stable_mosaic.version = 11 : i64} {
  func.func @_mlp_classifier_kernel(%arg0: memref<8x128xf32, #tpu.memory_space<vmem>>, %arg1: memref<1x128xf32, #tpu.memory_space<vmem>>, %arg2: memref<1x128xf32, #tpu.memory_space<vmem>>, %arg3: memref<128x128xf32, #tpu.memory_space<vmem>>, %arg4: memref<1x128xf32, #tpu.memory_space<vmem>>, %arg5: memref<8x128xf32, #tpu.memory_space<vmem>>) attributes {dimension_semantics = [], scalar_prefetch = 0 : i64, scratch_operands = 0 : i64, tpu.core_type = #tpu.core_type<tc>} {
    %c0 = arith.constant 0 : index
    %c0_0 = arith.constant 0 : index
    %0 = vector.load %arg0[%c0, %c0_0] : memref<8x128xf32, #tpu.memory_space<vmem>>, vector<8x128xf32>
    %1 = tpu.iota {dimensions = array<i32: 1>} : vector<8x128xi32>
    %c32_i32 = arith.constant 32 : i32
    %2 = vector.broadcast %c32_i32 : i32 to vector<8x128xi32>
    %3 = arith.cmpi slt, %1, %2 : vector<8x128xi32>
    %cst = arith.constant dense<0.000000e+00> : vector<8xf32>
    %4 = vector.multi_reduction <add>, %0, %cst [1] : vector<8x128xf32> to vector<8xf32>
    %5 = vector.shape_cast %4 : vector<8xf32> to vector<8x1xf32>
    %cst_1 = arith.constant 3.125000e-02 : f32
    %6 = vector.broadcast %cst_1 : f32 to vector<8x1xf32>
    %7 = arith.mulf %5, %6 : vector<8x1xf32>
    %8 = vector.broadcast %7 : vector<8x1xf32> to vector<8x128xf32>
    %9 = arith.subf %0, %8 : vector<8x128xf32>
    %cst_2 = arith.constant 0.000000e+00 : f32
    %10 = vector.broadcast %cst_2 : f32 to vector<8x128xf32>
    %11 = arith.select %3, %9, %10 : vector<8x128xi1>, vector<8x128xf32>
    %12 = arith.mulf %11, %11 : vector<8x128xf32>
    %cst_3 = arith.constant dense<0.000000e+00> : vector<8xf32>
    %13 = vector.multi_reduction <add>, %12, %cst_3 [1] : vector<8x128xf32> to vector<8xf32>
    %14 = vector.shape_cast %13 : vector<8xf32> to vector<8x1xf32>
    %cst_4 = arith.constant 3.125000e-02 : f32
    %15 = vector.broadcast %cst_4 : f32 to vector<8x1xf32>
    %16 = arith.mulf %14, %15 : vector<8x1xf32>
    %cst_5 = arith.constant 9.99999974E-6 : f32
    %17 = vector.broadcast %cst_5 : f32 to vector<8x1xf32>
    %18 = arith.addf %16, %17 : vector<8x1xf32>
    %19 = math.rsqrt %18 : vector<8x1xf32>
    %20 = vector.broadcast %19 : vector<8x1xf32> to vector<8x128xf32>
    %21 = arith.mulf %11, %20 : vector<8x128xf32>
    %c0_6 = arith.constant 0 : index
    %c0_7 = arith.constant 0 : index
    %22 = vector.load %arg1[%c0_6, %c0_7] : memref<1x128xf32, #tpu.memory_space<vmem>>, vector<1x128xf32>
    %23 = vector.broadcast %22 : vector<1x128xf32> to vector<8x128xf32>
    %24 = arith.mulf %21, %23 : vector<8x128xf32>
    %c0_8 = arith.constant 0 : index
    %c0_9 = arith.constant 0 : index
    %25 = vector.load %arg2[%c0_8, %c0_9] : memref<1x128xf32, #tpu.memory_space<vmem>>, vector<1x128xf32>
    %26 = vector.broadcast %25 : vector<1x128xf32> to vector<8x128xf32>
    %27 = arith.addf %24, %26 : vector<8x128xf32>
    %c0_10 = arith.constant 0 : index
    %c0_11 = arith.constant 0 : index
    %28 = vector.load %arg3[%c0_10, %c0_11] : memref<128x128xf32, #tpu.memory_space<vmem>>, vector<128x128xf32>
    %cst_12 = arith.constant dense<0.000000e+00> : vector<8x128xf32>
    %29 = tpu.matmul %27, %28, %cst_12 {dimension_numbers = #tpu.dot_dimension_numbers<[1], [0], [0], [1], [0, 0, 1, 1], [], []>} : vector<8x128xf32>, vector<128x128xf32>, vector<8x128xf32> -> vector<8x128xf32>
    %c0_13 = arith.constant 0 : index
    %c0_14 = arith.constant 0 : index
    %30 = vector.load %arg4[%c0_13, %c0_14] : memref<1x128xf32, #tpu.memory_space<vmem>>, vector<1x128xf32>
    %31 = vector.broadcast %30 : vector<1x128xf32> to vector<8x128xf32>
    %32 = arith.addf %29, %31 : vector<8x128xf32>
    %c0_15 = arith.constant 0 : index
    %c0_16 = arith.constant 0 : index
    %33 = vector.load %arg5[%c0_15, %c0_16] : memref<8x128xf32, #tpu.memory_space<vmem>>, vector<8x128xf32>
    tpu.vector_store %arg5[%c0_15, %c0_16], %32 {strides = array<i32>} : memref<8x128xf32, #tpu.memory_space<vmem>>, vector<8x128xf32>,
    return
  }
}

</mosaic_0001>

<llo_original>
// kernel: mlp_classifier.1
$region0: #{mlp_classifier.1}
  #allocation0 [shape = 'u32[]', space=smem, size = 0x4, offset = 0x4, fixed_abs, tag = 'smem constant byte address 0x4 - core index']
  #allocation1 [shape = 'u32[72,128]{1,0:T(1,128)}', space=vmem, size = 0x9000, scoped, tag = 'internal scratch']
  %s0 = inlined_call_operand.vmem [shape: f32[8,128], index: 0, kind: input, shape index: {}]
  %s1 = inlined_call_operand.vmem [shape: f32[1,128], index: 1, kind: input, shape index: {}]
  %s2 = inlined_call_operand.vmem [shape: f32[1,128], index: 2, kind: input, shape index: {}]
  %s3 = inlined_call_operand.vmem [shape: f32[128,128], index: 3, kind: input, shape index: {}]
  %s4 = inlined_call_operand.vmem [shape: f32[1,128], index: 4, kind: input, shape index: {}]
  %s5 = inlined_call_operand.hbm [shape: f32[8,128], index: 5, kind: output, shape index: {}]
  %s6 = sld [smem:[#allocation0]]
  $region30: #{mlp_classifier.1} parent=0
    _
  %s8 = ssub.s32 1, %s6
  %s9 = scalar_select 0, %s8, %s6
  $region1: #{mlp_classifier.1} parent=0
    #allocation2 [shape = 'u8[4096]{0}', space=vmem, size = 0x1000, scoped, tag = 'output window, operand 0, single buffered']
    #allocation3 [shape = 's32[1]{0}', space=sflag, size = 0x4, scoped, tag = 'scoped memory for mlp_classifier.1']
    %10 = vsyncpa [#allocation3], 0
    // Predicated region
    $region2: #{mlp_classifier.1} parent=1 // pred_check
      _
    $region3: #{mlp_classifier.1} parent=1 // pred_check_branch
      %12 = sbr.rel (0) target = $region5
    $region4: #{mlp_classifier.1} parent=1 // pred_region
      _
    $region5: #{mlp_classifier.1} parent=1 // pred_fallthru
      _
    // Predicated region
    $region6: #{mlp_classifier.1} parent=1 // pred_check
      _
    $region7: #{mlp_classifier.1} parent=1 // pred_check_branch
      %14 = sbr.rel (0) target = $region9
    $region8: #{mlp_classifier.1} parent=1 // pred_region
      _
    $region9: #{mlp_classifier.1} parent=1 // pred_fallthru
      _
    // Predicated region
    $region10: #{mlp_classifier.1} parent=1 // pred_check
      _
    $region11: #{mlp_classifier.1} parent=1 // pred_check_branch
      %16 = sbr.rel (0) target = $region13
    $region12: #{mlp_classifier.1} parent=1 // pred_region
      _
    $region13: #{mlp_classifier.1} parent=1 // pred_fallthru
      _
    // Predicated region
    $region14: #{mlp_classifier.1} parent=1 // pred_check
      _
    $region15: #{mlp_classifier.1} parent=1 // pred_check_branch
      %18 = sbr.rel (0) target = $region17
    $region16: #{mlp_classifier.1} parent=1 // pred_region
      _
    $region17: #{mlp_classifier.1} parent=1 // pred_fallthru
      _
    // Predicated region
    $region18: #{mlp_classifier.1} parent=1 // pred_check
      _
    $region19: #{mlp_classifier.1} parent=1 // pred_check_branch
      %20 = sbr.rel (0) target = $region21
    $region20: #{mlp_classifier.1} parent=1 // pred_region
      _
    $region21: #{mlp_classifier.1} parent=1 // pred_fallthru
      _
    %v21 = vld [vmem:[%s0] sm:$0xff]
    %v22 = vlaneseq
    %v23 = vand.u32 %v22, 127
    %vm24 = vcmp.lt.s32.totalorder %v23, 32
    %25 = vadd.xlane.f32.xlu0 %v21
    %v26 = vpop.xlane.xlu0 %25
    %v27 = vmul.f32 %v26, 0.03125
    %v28 = vsub.f32 %v21, %v27
    %v29 = vsel %vm24, %v28, 0.0
    %v30 = vmul.f32 %v29, %v29
    %31 = vadd.xlane.f32.xlu0 %v30
    %v32 = vpop.xlane.xlu0 %31
    %v33 = vmul.f32 %v32, 0.03125
    %v34 = vadd.f32 %v33, 1e-05
    %v35 = vrsqrt.pop %v34
    %v36 = vmul.f32 %v35, %v34
    %v37 = vmul.f32 %v36, %v35
    %v38 = vmul.f32 0.5, %v37
    %v39 = vsub.f32 1.5, %v38
    %v40 = vmul.f32 %v35, %v39
    %vm41 = vweird.f32 %v34
    %vm42 = vweird.f32 %v35
    %vm43 = vmor %vm41, %vm42
    %v44 = vsel %vm43, %v35, %v40
    %v45 = vmul.f32 %v29, %v44
    %v46 = vld [vmem:[%s1] sm:$0x1]
    %v48 = vperm.slane %v46, 0
    %v50 = vmul.f32 %v45, %v48
    %v51 = vld [vmem:[%s2] sm:$0x1]
    %v53 = vperm.slane %v51, 0
    %v55 = vadd.f32 %v50, %v53
    %v56 = vld [vmem:[%s3] sm:$0xff]
    %v57 = vld [vmem:[%s3 + $0x8] sm:$0xff]
    %v58 = vld [vmem:[%s3 + $0x10] sm:$0xff]
    %v59 = vld [vmem:[%s3 + $0x18] sm:$0xff]
    %v60 = vld [vmem:[%s3 + $0x20] sm:$0xff]
    %v61 = vld [vmem:[%s3 + $0x28] sm:$0xff]
    %v62 = vld [vmem:[%s3 + $0x30] sm:$0xff]
    %v63 = vld [vmem:[%s3 + $0x38] sm:$0xff]
    %v64 = vld [vmem:[%s3 + $0x40] sm:$0xff]
    %v65 = vld [vmem:[%s3 + $0x48] sm:$0xff]
    %v66 = vld [vmem:[%s3 + $0x50] sm:$0xff]
    %v67 = vld [vmem:[%s3 + $0x58] sm:$0xff]
    %v68 = vld [vmem:[%s3 + $0x60] sm:$0xff]
    %v69 = vld [vmem:[%s3 + $0x68] sm:$0xff]
    %v70 = vld [vmem:[%s3 + $0x70] sm:$0xff]
    %v71 = vld [vmem:[%s3 + $0x78] sm:$0xff]
    %v72 = vld [vmem:[%s4] sm:$0x1]
    %v74 = vperm.slane %v72, 0
    %76 = vmatpush.msra.mxu0 %v71
    %77 = vmatpush.msra.mxu0 %v70
    %78 = vmatpush.msra.mxu0 %v69
    %79 = vmatpush.msra.mxu0 %v68
    %80 = vmatpush.msra.mxu0 %v67
    %81 = vmatpush.msra.mxu0 %v66
    %82 = vmatpush.msra.mxu0 %v65
    %83 = vmatpush.msra.mxu0 %v64
    %84 = vmatpush.msra.mxu0 %v63
    %85 = vmatpush.msra.mxu0 %v62
    %86 = vmatpush.msra.mxu0 %v61
    %87 = vmatpush.msra.mxu0 %v60
    %88 = vmatpush.msra.mxu0 %v59
    %89 = vmatpush.msra.mxu0 %v58
    %90 = vmatpush.msra.mxu0 %v57
    %91 = vmatpush.msra.mxu0 %v56
    %92 = vmatmul.f32.gmra.mxu0 %v55
    %v93 = vpop.f32.mrf.mxu0
    %v94 = vadd.f32 %v74, %v93
    %95 = vdwg.mxu0
    %96 = vst [vmem:[#allocation2] sm:$0xff] %v94
    // Predicated region
    $region22: #{mlp_classifier.1} parent=1 // pred_check
      _
    $region23: #{mlp_classifier.1} parent=1 // pred_check_branch
      %98 = sbr.rel (0) target = $region25
    $region24: #{mlp_classifier.1} parent=1 // pred_region
      %100 = vsyncadd [#allocation3], 0
      %s102 = sshll.u32 [#allocation2], 4
      %s103 = int_to_ptr.vmem [resolvable:$true] %s102
      %s104 = sshll.u32 %s5, 4
      %s105 = int_to_ptr.hbm [resolvable:$true] %s104
      %107 = dma.vmem_to_hbm [thread:$0]  %s103, 128, %s105, [#allocation3]
    $region25: #{mlp_classifier.1} parent=1 // pred_fallthru
      _
    // Predicated region
    $region26: #{mlp_classifier.1} parent=1 // pred_check
      _
    $region27: #{mlp_classifier.1} parent=1 // pred_check_branch
      %109 = sbr.rel (0) target = $region29
    $region28: #{mlp_classifier.1} parent=1 // pred_region
      %111 = dma.done [#allocation3], 128
    $region29: #{mlp_classifier.1} parent=1 // pred_fallthru
      _
    %112 = vsyncpa [#allocation3], 1

</llo_original>
